<compile_context>
chip_gen: v7x
topology: tpu7x:2x2x1
jax: 0.10.0
libtpu: 0.0.40
codegen_flags: <defaults>
</compile_context>

<pallas_src>
import math

import jax
import jax.numpy as jnp
from jax.experimental import pallas as pl
from jax.experimental.pallas import tpu as pltpu


def _round_up(x, m):
    return ((x + m - 1) // m) * m


def _largest_aligned_divisor(total, align, cap):
    """Largest d with d % align == 0, total % d == 0, d <= cap (total % align == 0)."""
    cap = max(align, min(cap, total))
    best = align
    d = align
    while d <= cap:
        if total % d == 0:
            best = d
        d += align
    return best


def _physical_vmem_bytes():
    try:
        return int(pltpu.get_tpu_info().vmem_capacity_bytes)
    except Exception:
        return 64 * 1024 * 1024  # conservative (v7x per-TC size)


# --------------------- support = input @ weight (once) ----------------------

def _support_kernel(x_ref, w_ref, out_ref):
    # f32 matmul on the MXU, cast to bf16 only at the store so support never
    # hits HBM in f32.
    out_ref[...] = jnp.dot(
        x_ref[...], w_ref[...], preferred_element_type=jnp.float32
    ).astype(out_ref.dtype)


def _compute_support(x_pad, w_pad, *, tile_rows, out_dtype, vmem_cap):
    n_pad, in_f = x_pad.shape
    out_p = w_pad.shape[1]
    # TODO(synk): for very large in_f (>= ~4-8K) add an in_f reduction grid
    # axis (same pl.when accumulator pattern as the aggregate kernel) instead
    # of keeping the full weight resident.
    est = (
        2 * tile_rows * in_f * 4      # x tiles (double-buffered, f32)
        + 2 * in_f * out_p * 4        # resident weight (f32)
        + 2 * tile_rows * out_p * 2   # bf16 output tiles
    )
    vmem_limit = min(vmem_cap, max(int(est * 1.25), 16 * 1024 * 1024))
    return pl.pallas_call(
        _support_kernel,
        out_shape=jax.ShapeDtypeStruct((n_pad, out_p), out_dtype),
        grid_spec=pltpu.PrefetchScalarGridSpec(
            num_scalar_prefetch=0,
            grid=(n_pad // tile_rows,),
            in_specs=[
                pl.BlockSpec((tile_rows, in_f), lambda i: (i, 0)),
                pl.BlockSpec((in_f, out_p), lambda i: (0, 0)),
            ],
            out_specs=pl.BlockSpec((tile_rows, out_p), lambda i: (i, 0)),
        ),
        compiler_params=pltpu.CompilerParams(
            dimension_semantics=("parallel",),
            vmem_limit_bytes=vmem_limit,
        ),
    )(x_pad, w_pad)


# ------------- output = adj @ support + bias (tiled (i, k) grid) -------------

def _make_aggregate_kernel(tk, support_resident):
    def kernel(adj_ref, sup_ref, b_ref, out_ref):
        k = pl.program_id(1)

        # Output block is resident across k (index_map ignores k): use it as
        # the f32 accumulator, initialised to the broadcast bias.
        @pl.when(k == 0)
        def _():
            out_ref[...] = jnp.broadcast_to(b_ref[...], out_ref.shape)

        if support_resident:
            start = pl.multiple_of(k * tk, 128)
            sup = sup_ref[pl.ds(start, tk), :]
        else:
            sup = sup_ref[...]

        # Steady state: bf16 x bf16 MXU matmul, f32 accumulate into out_ref.
        out_ref[...] += jnp.dot(
            adj_ref[...], sup, preferred_element_type=jnp.float32
        )

    return kernel


def graph_convolution(inp, weight, adj, bias=None):
    """inp: [N, in_f], weight: [in_f, out_f], adj: [N, N], bias: [out_f] or None."""
    n, in_f = inp.shape
    out_f = weight.shape[1]
    out_dtype = jnp.float32
    stream_dtype = jnp.bfloat16  # adj / support streaming dtype

    if bias is None:
        bias = jnp.zeros((out_f,), jnp.float32)

    # Lane-dense output: pad out_features up to a multiple of 128 (kept at 128
    # minimum on purpose -- the kernel is adj-bandwidth bound, so half-width
    # MXU fill on v6e/v7x is hidden and padding to 256 would only add bytes).
    out_p = _round_up(out_f, 128)
    n_pad = _round_up(n, 128)

    # Tile sizes: divisors of n_pad so the adjacency needs no (or only a thin)
    # padding copy.  bf16 adj => tm multiple of 16 (128 here), tk mult. of 128.
    tk = _largest_aligned_divisor(n_pad, 128, 2048)
    tm = _largest_aligned_divisor(n_pad, 128, 512)
    # Keep >= 2 row tiles when possible so the "parallel" axis feeds both
    # TensorCores on v7x.
    if n_pad // tm < 2 and n_pad >= 256:
        tm = _largest_aligned_divisor(n_pad, 128, n_pad // 2)

    phys_vmem = _physical_vmem_bytes()
    vmem_cap = int(phys_vmem * 0.75)

    itemsize = jnp.dtype(stream_dtype).itemsize

    # Keep support fully VMEM-resident across the (i, k) grid when it fits.
    sup_bytes = n_pad * out_p * itemsize
    support_resident = sup_bytes <= 8 * 1024 * 1024

    # Zero-padded / cast operands.  Padding contributes exact zeros; when N is
    # already 128-aligned no N^2 copy besides the one-time bf16 cast is made.
    w_pad = weight
    if out_p != out_f:
        w_pad = jnp.zeros((in_f, out_p), weight.dtype).at[:, :out_f].set(weight)
    b_pad = jnp.zeros((1, out_p), jnp.float32).at[0, :out_f].set(
        bias.astype(jnp.float32)
    )
    x_pad = inp
    if n_pad != n:
        x_pad = jnp.zeros((n_pad, in_f), inp.dtype).at[:n, :].set(inp)
    if n_pad == n:
        adj_p = adj.astype(stream_dtype)
    else:
        adj_p = (
            jnp.zeros((n_pad, n_pad), stream_dtype)
            .at[:n, :n]
            .set(adj.astype(stream_dtype))
        )

    # (1) support = input @ weight  (bf16 out), hoisted out of the adj loop.
    tile_rows = _largest_aligned_divisor(n_pad, 128, 512)
    support = _compute_support(
        x_pad, w_pad, tile_rows=tile_rows, out_dtype=stream_dtype,
        vmem_cap=vmem_cap,
    )

    # (2) output = adj @ support + bias, tiled (row, k) reduction.
    agg_bytes = (
        2 * tm * tk * itemsize                               # adj tiles (x2)
        + (2 * sup_bytes if support_resident
           else 2 * tk * out_p * itemsize)                   # support
        + 2 * tm * out_p * 4                                 # f32 out/acc
        + 2 * 8 * out_p * 4                                  # bias (padded)
    )
    agg_vmem = min(vmem_cap, max(int(agg_bytes * 1.25), 16 * 1024 * 1024))

    if support_resident:
        sup_spec = pl.BlockSpec((n_pad, out_p), lambda i, k: (0, 0))
    else:
        sup_spec = pl.BlockSpec((tk, out_p), lambda i, k: (k, 0))

    # TODO(synk): on v5e, if profiling shows exposed adj DMA at row-tile
    # boundaries, add pipeline_mode=pl.Buffered(3) to the adj BlockSpec.
    out_pad = pl.pallas_call(
        _make_aggregate_kernel(tk, support_resident),
        out_shape=jax.ShapeDtypeStruct((n_pad, out_p), out_dtype),
        grid_spec=pltpu.PrefetchScalarGridSpec(
            num_scalar_prefetch=0,
            grid=(n_pad // tm, n_pad // tk),
            in_specs=[
                pl.BlockSpec((tm, tk), lambda i, k: (i, k)),      # adj (bf16)
                sup_spec,                                         # support
                pl.BlockSpec((1, out_p), lambda i, k: (0, 0)),    # bias (f32)
            ],
            out_specs=pl.BlockSpec((tm, out_p), lambda i, k: (i, 0)),
        ),
        compiler_params=pltpu.CompilerParams(
            dimension_semantics=("parallel", "arbitrary"),
            vmem_limit_bytes=agg_vmem,
        ),
    )(adj_p, support, b_pad)

    return out_pad[:n, :out_f]


if __name__ == "__main__":
    # Small, TPU-tile-friendly shapes (latency bound at this size; the tiling
    # pays off at large N / batched layers).
    N = 128          # number of graph nodes
    IN_FEATURES = 64
    OUT_FEATURES = 32

    key = jax.random.PRNGKey(0)
    k_inp, k_adj, k_w, k_b = jax.random.split(key, 4)

    # Deterministic parameter init mirroring reset_parameters():
    # uniform(-stdv, stdv) with stdv = 1 / sqrt(out_features)
    stdv = 1.0 / math.sqrt(OUT_FEATURES)
    weight = jax.random.uniform(
        k_w, (IN_FEATURES, OUT_FEATURES), jnp.float32, minval=-stdv, maxval=stdv
    )
    bias = jax.random.uniform(
        k_b, (OUT_FEATURES,), jnp.float32, minval=-stdv, maxval=stdv
    )

    # Example inputs: node features and a (densified) normalized adjacency.
    x = jax.random.normal(k_inp, (N, IN_FEATURES), jnp.float32)
    adj_raw = (jax.random.uniform(k_adj, (N, N)) < 0.1).astype(jnp.float32)
    adj = adj_raw + jnp.eye(N, dtype=jnp.float32)          # add self-loops
    adj = adj / jnp.sum(adj, axis=1, keepdims=True)        # row-normalize

    out = graph_convolution(x, weight, adj, bias)
    out = jax.block_until_ready(out)
    assert out.shape == (N, OUT_FEATURES)

    # Reference matching the kernel's bf16 streaming of adj/support (tight-ish
    # tolerance), plus the pure-f32 module reference (loosened for bf16).
    sup_bf = (x @ weight).astype(jnp.bfloat16).astype(jnp.float32)
    adj_bf = adj.astype(jnp.bfloat16).astype(jnp.float32)
    ref_bf = adj_bf @ sup_bf + bias
    ref_f32 = adj @ (x @ weight) + bias

    assert jnp.allclose(out, ref_bf, atol=1e-2, rtol=1e-2)
    assert jnp.allclose(out, ref_f32, atol=3e-2, rtol=3e-2)

    print("KERNEL_OK")
</pallas_src>

<mosaic_0001>
module attributes {stable_mosaic.version = 11 : i64} {
  func.func @_support_kernel(%arg0: i32, %arg1: memref<128x64xf32, #tpu.memory_space<vmem>>, %arg2: memref<64x128xf32, #tpu.memory_space<vmem>>, %arg3: memref<128x128xbf16, #tpu.memory_space<vmem>>) attributes {dimension_semantics = [#tpu.dimension_semantics<parallel>], iteration_bounds = array<i64: 1>, scalar_prefetch = 0 : i64, scratch_operands = 0 : i64, tpu.core_type = #tpu.core_type<tc>, window_params = [{transform_indices = @transform_0, window_bounds = array<i64: 128, 64>}, {pipeline_mode = #tpu.pipeline_mode<synchronous>, transform_indices = @transform_1, window_bounds = array<i64: 64, 128>}, {transform_indices = @transform_2, window_bounds = array<i64: 128, 128>}]} {
    %c0 = arith.constant 0 : index
    %c0_0 = arith.constant 0 : index
    %0 = vector.load %arg1[%c0, %c0_0] : memref<128x64xf32, #tpu.memory_space<vmem>>, vector<128x64xf32>
    %c0_1 = arith.constant 0 : index
    %c0_2 = arith.constant 0 : index
    %1 = vector.load %arg2[%c0_1, %c0_2] : memref<64x128xf32, #tpu.memory_space<vmem>>, vector<64x128xf32>
    %cst = arith.constant dense<0.000000e+00> : vector<128x128xf32>
    %2 = tpu.matmul %0, %1, %cst {dimension_numbers = #tpu.dot_dimension_numbers<[1], [0], [0], [1], [0, 0, 1, 1], [], []>} : vector<128x64xf32>, vector<64x128xf32>, vector<128x128xf32> -> vector<128x128xf32>
    %3 = arith.truncf %2 : vector<128x128xf32> to vector<128x128xbf16>
    %c0_3 = arith.constant 0 : index
    %c0_4 = arith.constant 0 : index
    %4 = vector.load %arg3[%c0_3, %c0_4] : memref<128x128xbf16, #tpu.memory_space<vmem>>, vector<128x128xbf16>
    tpu.vector_store %arg3[%c0_3, %c0_4], %3 {strides = array<i32>} : memref<128x128xbf16, #tpu.memory_space<vmem>>, vector<128x128xbf16>,
    return
  }
  func.func @transform_0(%arg0: i32) -> (i32, i32) {
    %c0_i32 = arith.constant 0 : i32
    %c0_i32_0 = arith.constant 0 : i32
    return %arg0, %c0_i32 : i32, i32
  }
  func.func @transform_1(%arg0: i32) -> (i32, i32) {
    %c0_i32 = arith.constant 0 : i32
    %c0_i32_0 = arith.constant 0 : i32
    %c0_i32_1 = arith.constant 0 : i32
    return %c0_i32, %c0_i32_0 : i32, i32
  }
  func.func @transform_2(%arg0: i32) -> (i32, i32) {
    %c0_i32 = arith.constant 0 : i32
    %c0_i32_0 = arith.constant 0 : i32
    return %arg0, %c0_i32 : i32, i32
  }
}

</mosaic_0001>

<llo_original>
// kernel: tpu_custom_call.1
$region0: #{tpu_custom_call.1}
  #allocation0 [shape = 'u32[]', space=smem, size = 0x4, offset = 0x4, fixed_abs, tag = 'smem constant byte address 0x4 - core index']
  #allocation1 [shape = 'u32[144,128]{1,0:T(1,128)}', space=vmem, size = 0x12000, scoped, tag = 'internal scratch']
  %s0 = inlined_call_operand.vmem [shape: f32[128,64], index: 0, kind: input, shape index: {}]
  %s1 = inlined_call_operand.vmem [shape: f32[64,128], index: 1, kind: input, shape index: {}]
  %s2 = inlined_call_operand.hbm [shape: bf16[128,128], index: 2, kind: output, shape index: {}]
  %s3 = sld [smem:[#allocation0]]
  $region18: #{tpu_custom_call.1} parent=0
    _
  %s5 = ssub.s32 1, %s3
  %s6 = scalar_select 0, %s5, %s3
  $region1: #{tpu_custom_call.1} parent=0
    #allocation2 [shape = 'u8[32768]{0}', space=vmem, size = 0x8000, scoped, tag = 'output window, operand 0, single buffered']
    #allocation3 [shape = 's32[1]{0}', space=sflag, size = 0x4, scoped, tag = 'scoped memory for tpu_custom_call.1']
    %7 = vsyncpa [#allocation3], 0
    // Predicated region
    $region2: #{tpu_custom_call.1} parent=1 // pred_check
      _
    $region3: #{tpu_custom_call.1} parent=1 // pred_check_branch
      %9 = sbr.rel (0) target = $region5
    $region4: #{tpu_custom_call.1} parent=1 // pred_region
      _
    $region5: #{tpu_custom_call.1} parent=1 // pred_fallthru
      _
    // Predicated region
    $region6: #{tpu_custom_call.1} parent=1 // pred_check
      _
    $region7: #{tpu_custom_call.1} parent=1 // pred_check_branch
      %11 = sbr.rel (0) target = $region9
    $region8: #{tpu_custom_call.1} parent=1 // pred_region
      _
    $region9: #{tpu_custom_call.1} parent=1 // pred_fallthru
      _
    %v12 = vld [vmem:[%s0] sm:$0xff]
    %v13 = vld [vmem:[%s0 + $0x8] sm:$0xff]
    %v14 = vld [vmem:[%s0 + $0x10] sm:$0xff]
    %v15 = vld [vmem:[%s0 + $0x18] sm:$0xff]
    %v16 = vld [vmem:[%s0 + $0x20] sm:$0xff]
    %v17 = vld [vmem:[%s0 + $0x28] sm:$0xff]
    %v18 = vld [vmem:[%s0 + $0x30] sm:$0xff]
    %v19 = vld [vmem:[%s0 + $0x38] sm:$0xff]
    %v20 = vld [vmem:[%s0 + $0x40] sm:$0xff]
    %v21 = vld [vmem:[%s0 + $0x48] sm:$0xff]
    %v22 = vld [vmem:[%s0 + $0x50] sm:$0xff]
    %v23 = vld [vmem:[%s0 + $0x58] sm:$0xff]
    %v24 = vld [vmem:[%s0 + $0x60] sm:$0xff]
    %v25 = vld [vmem:[%s0 + $0x68] sm:$0xff]
    %v26 = vld [vmem:[%s0 + $0x70] sm:$0xff]
    %v27 = vld [vmem:[%s0 + $0x78] sm:$0xff]
    %v28 = vld [vmem:[%s1] sm:$0xff]
    %v29 = vld [vmem:[%s1 + $0x8] sm:$0xff]
    %v30 = vld [vmem:[%s1 + $0x10] sm:$0xff]
    %v31 = vld [vmem:[%s1 + $0x18] sm:$0xff]
    %v32 = vld [vmem:[%s1 + $0x20] sm:$0xff]
    %v33 = vld [vmem:[%s1 + $0x28] sm:$0xff]
    %v34 = vld [vmem:[%s1 + $0x30] sm:$0xff]
    %v35 = vld [vmem:[%s1 + $0x38] sm:$0xff]
    %vm36 = vcmask 523264
    %v38 = vsel %vm36, %v12, 0
    %v41 = vsel %vm36, %v13, 0
    %v44 = vsel %vm36, %v14, 0
    %v47 = vsel %vm36, %v15, 0
    %v50 = vsel %vm36, %v16, 0
    %v53 = vsel %vm36, %v17, 0
    %v56 = vsel %vm36, %v18, 0
    %v59 = vsel %vm36, %v19, 0
    %v62 = vsel %vm36, %v20, 0
    %v65 = vsel %vm36, %v21, 0
    %v68 = vsel %vm36, %v22, 0
    %v71 = vsel %vm36, %v23, 0
    %v74 = vsel %vm36, %v24, 0
    %v77 = vsel %vm36, %v25, 0
    %v80 = vsel %vm36, %v26, 0
    %v83 = vsel %vm36, %v27, 0
    %85 = vmatprep.subr.mxu0 0.0
    %86 = vmatpush1.msra.mxu0 %v28
    %87 = vmatprep.subr.mxu0 0.0
    %88 = vmatpush1.msra.mxu0 %v29
    %89 = vmatprep.subr.mxu0 0.0
    %90 = vmatpush1.msra.mxu0 %v30
    %91 = vmatprep.subr.mxu0 0.0
    %92 = vmatpush1.msra.mxu0 %v31
    %93 = vmatprep.subr.mxu0 0.0
    %94 = vmatpush1.msra.mxu0 %v32
    %95 = vmatprep.subr.mxu0 0.0
    %96 = vmatpush1.msra.mxu0 %v33
    %97 = vmatprep.subr.mxu0 0.0
    %98 = vmatpush1.msra.mxu0 %v34
    %99 = vmatprep.subr.mxu0 0.0
    %100 = vmatpush1.msra.mxu0 %v35
    %101 = vmatprep.subr.mxu0 0.0
    %102 = vmatpush1.msra.mxu0 0.0
    %103 = vmatprep.subr.mxu0 0.0
    %104 = vmatpush1.msra.mxu0 0.0
    %105 = vmatprep.subr.mxu0 0.0
    %106 = vmatpush1.msra.mxu0 0.0
    %107 = vmatprep.subr.mxu0 0.0
    %108 = vmatpush1.msra.mxu0 0.0
    %109 = vmatprep.subr.mxu0 0.0
    %110 = vmatpush1.msra.mxu0 0.0
    %111 = vmatprep.subr.mxu0 0.0
    %112 = vmatpush1.msra.mxu0 0.0
    %113 = vmatprep.subr.mxu0 0.0
    %114 = vmatpush1.msra.mxu0 0.0
    %115 = vmatprep.subr.mxu0 0.0
    %116 = vmatpush1.msra.mxu0 0.0
    %117 = vmatprep.subr.mxu0 0.0
    %118 = vmatpush1.msra.mxu0 0.0
    %119 = vmatprep.subr.mxu0 0.0
    %120 = vmatpush1.msra.mxu0 0.0
    %121 = vmatprep.subr.mxu0 0.0
    %122 = vmatpush1.msra.mxu0 0.0
    %123 = vmatprep.subr.mxu0 0.0
    %124 = vmatpush1.msra.mxu0 0.0
    %125 = vmatprep.subr.mxu0 0.0
    %126 = vmatpush1.msra.mxu0 0.0
    %127 = vmatprep.subr.mxu0 0.0
    %128 = vmatpush1.msra.mxu0 0.0
    %129 = vmatprep.subr.mxu0 0.0
    %130 = vmatpush1.msra.mxu0 0.0
    %131 = vmatprep.subr.mxu0 0.0
    %132 = vmatpush1.msra.mxu0 0.0
    %133 = vmatprep.subr.mxu0 0.0
    %134 = vmatpush1.msra.mxu0 0.0
    %135 = vmatprep.subr.mxu0 0.0
    %136 = vmatpush1.msra.mxu0 0.0
    %137 = vmatprep.subr.mxu0 0.0
    %138 = vmatpush1.msra.mxu0 0.0
    %139 = vmatprep.subr.mxu0 0.0
    %140 = vmatpush1.msra.mxu0 0.0
    %141 = vmatprep.subr.mxu0 0.0
    %142 = vmatpush1.msra.mxu0 0.0
    %143 = vmatprep.subr.mxu0 0.0
    %144 = vmatpush1.msra.mxu0 0.0
    %145 = vmatprep.subr.mxu0 0.0
    %146 = vmatpush1.msra.mxu0 0.0
    %147 = vmatprep.subr.mxu0 0.0
    %148 = vmatpush1.msra.mxu0 0.0
    %149 = vmatprep.mubr.f32.mxu0 0.0
    %150 = vmatmul.mubr.f32.gmra.mrb[0].mxu0 %v38
    %v151 = vpop.f32.mrb[0].mxu0
    %v152 = vadd.f32 0.0, %v151
    %v153 = vpop.f32.mrb[0].mxu0
    %154 = vmatprep.mubr.f32.mxu0 0.0
    %155 = vmatmul.mubr.f32.gmra.mrb[0].mxu0 %v41
    %v156 = vpop.f32.mrb[0].mxu0
    %v157 = vadd.f32 0.0, %v156
    %v158 = vpop.f32.mrb[0].mxu0
    %159 = vmatprep.mubr.f32.mxu0 0.0
    %160 = vmatmul.mubr.f32.gmra.mrb[0].mxu0 %v44
    %v161 = vpop.f32.mrb[0].mxu0
    %v162 = vadd.f32 0.0, %v161
    %v163 = vpop.f32.mrb[0].mxu0
    %164 = vmatprep.mubr.f32.mxu0 0.0
    %165 = vmatmul.mubr.f32.gmra.mrb[0].mxu0 %v47
    %v166 = vpop.f32.mrb[0].mxu0
    %v167 = vadd.f32 0.0, %v166
    %v168 = vpop.f32.mrb[0].mxu0
    %169 = vmatprep.mubr.f32.mxu0 0.0
    %170 = vmatmul.mubr.f32.gmra.mrb[0].mxu0 %v50
    %v171 = vpop.f32.mrb[0].mxu0
    %v172 = vadd.f32 0.0, %v171
    %v173 = vpop.f32.mrb[0].mxu0
    %174 = vmatprep.mubr.f32.mxu0 0.0
    %175 = vmatmul.mubr.f32.gmra.mrb[0].mxu0 %v53
    %v176 = vpop.f32.mrb[0].mxu0
    %v177 = vadd.f32 0.0, %v176
    %v178 = vpop.f32.mrb[0].mxu0
    %179 = vmatprep.mubr.f32.mxu0 0.0
    %180 = vmatmul.mubr.f32.gmra.mrb[0].mxu0 %v56
    %v181 = vpop.f32.mrb[0].mxu0
    %v182 = vadd.f32 0.0, %v181
    %v183 = vpop.f32.mrb[0].mxu0
    %184 = vmatprep.mubr.f32.mxu0 0.0
    %185 = vmatmul.mubr.f32.gmra.mrb[0].mxu0 %v59
    %v186 = vpop.f32.mrb[0].mxu0
    %v187 = vadd.f32 0.0, %v186
    %v188 = vpop.f32.mrb[0].mxu0
    %189 = vmatprep.mubr.f32.mxu0 0.0
    %190 = vmatmul.mubr.f32.gmra.mrb[0].mxu0 %v62
    %v191 = vpop.f32.mrb[0].mxu0
    %v192 = vadd.f32 0.0, %v191
    %v193 = vpop.f32.mrb[0].mxu0
    %194 = vmatprep.mubr.f32.mxu0 0.0
    %195 = vmatmul.mubr.f32.gmra.mrb[0].mxu0 %v65
    %v196 = vpop.f32.mrb[0].mxu0
    %v197 = vadd.f32 0.0, %v196
    %v198 = vpop.f32.mrb[0].mxu0
    %199 = vmatprep.mubr.f32.mxu0 0.0
    %200 = vmatmul.mubr.f32.gmra.mrb[0].mxu0 %v68
    %v201 = vpop.f32.mrb[0].mxu0
    %v202 = vadd.f32 0.0, %v201
    %v203 = vpop.f32.mrb[0].mxu0
    %204 = vmatprep.mubr.f32.mxu0 0.0
    %205 = vmatmul.mubr.f32.gmra.mrb[0].mxu0 %v71
    %v206 = vpop.f32.mrb[0].mxu0
    %v207 = vadd.f32 0.0, %v206
    %v208 = vpop.f32.mrb[0].mxu0
    %209 = vmatprep.mubr.f32.mxu0 0.0
    %210 = vmatmul.mubr.f32.gmra.mrb[0].mxu0 %v74
    %v211 = vpop.f32.mrb[0].mxu0
    %v212 = vadd.f32 0.0, %v211
    %v213 = vpop.f32.mrb[0].mxu0
    %214 = vmatprep.mubr.f32.mxu0 0.0
    %215 = vmatmul.mubr.f32.gmra.mrb[0].mxu0 %v77
    %v216 = vpop.f32.mrb[0].mxu0
    %v217 = vadd.f32 0.0, %v216
    %v218 = vpop.f32.mrb[0].mxu0
    %219 = vmatprep.mubr.f32.mxu0 0.0
    %220 = vmatmul.mubr.f32.gmra.mrb[0].mxu0 %v80
    %v221 = vpop.f32.mrb[0].mxu0
    %v222 = vadd.f32 0.0, %v221
    %v223 = vpop.f32.mrb[0].mxu0
    %224 = vmatprep.mubr.f32.mxu0 0.0
    %225 = vmatmul.mubr.f32.gmra.mrb[0].mxu0 %v83
    %v226 = vpop.f32.mrb[0].mxu0
    %v227 = vadd.f32 0.0, %v226
    %v228 = vpop.f32.mrb[0].mxu0
    %229 = vdwg.mxu0
    %v230 = vpack.c.bf16 %v157, %v152
    %v231 = vpack.c.bf16 %v167, %v162
    %v232 = vpack.c.bf16 %v177, %v172
    %v233 = vpack.c.bf16 %v187, %v182
    %v234 = vpack.c.bf16 %v197, %v192
    %v235 = vpack.c.bf16 %v207, %v202
    %v236 = vpack.c.bf16 %v217, %v212
    %v237 = vpack.c.bf16 %v227, %v222
    %v246 = vunpack.c.l.b16 %v230
    %v247 = vunpack.c.h.b16 %v230
    %v248 = vunpack.c.l.b16 %v231
    %v249 = vunpack.c.h.b16 %v231
    %v250 = vunpack.c.l.b16 %v232
    %v251 = vunpack.c.h.b16 %v232
    %v252 = vunpack.c.l.b16 %v233
    %v253 = vunpack.c.h.b16 %v233
    %v254 = vunpack.c.l.b16 %v234
    %v255 = vunpack.c.h.b16 %v234
    %v256 = vunpack.c.l.b16 %v235
    %v257 = vunpack.c.h.b16 %v235
    %v258 = vunpack.c.l.b16 %v236
    %v259 = vunpack.c.h.b16 %v236
    %v260 = vunpack.c.l.b16 %v237
    %v261 = vunpack.c.h.b16 %v237
    %v262 = vpack.c.b16 %v246, %v246
    %v263 = vpack.c.b16 %v247, %v247
    %v264 = vpack.c.b16 %v248, %v248
    %v265 = vpack.c.b16 %v249, %v249
    %v266 = vpack.c.b16 %v250, %v250
    %v267 = vpack.c.b16 %v251, %v251
    %v268 = vpack.c.b16 %v252, %v252
    %v269 = vpack.c.b16 %v253, %v253
    %v270 = vpack.c.b16 %v254, %v254
    %v271 = vpack.c.b16 %v255, %v255
    %v272 = vpack.c.b16 %v256, %v256
    %v273 = vpack.c.b16 %v257, %v257
    %v274 = vpack.c.b16 %v258, %v258
    %v275 = vpack.c.b16 %v259, %v259
    %v276 = vpack.c.b16 %v260, %v260
    %v277 = vpack.c.b16 %v261, %v261
    %294 = vst [vmem:[#allocation2] sm:$0xf] %v262
    %295 = vst [vmem:[#allocation2 + $0x4] sm:$0xf] %v263
    %296 = vst [vmem:[#allocation2 + $0x8] sm:$0xf] %v264
    %297 = vst [vmem:[#allocation2 + $0xc] sm:$0xf] %v265
    %298 = vst [vmem:[#allocation2 + $0x10] sm:$0xf] %v266
    %299 = vst [vmem:[#allocation2 + $0x14] sm:$0xf] %v267
    %300 = vst [vmem:[#allocation2 + $0x18] sm:$0xf] %v268
    %301 = vst [vmem:[#allocation2 + $0x1c] sm:$0xf] %v269
    %302 = vst [vmem:[#allocation2 + $0x20] sm:$0xf] %v270
    %303 = vst [vmem:[#allocation2 + $0x24] sm:$0xf] %v271
    %304 = vst [vmem:[#allocation2 + $0x28] sm:$0xf] %v272
    %305 = vst [vmem:[#allocation2 + $0x2c] sm:$0xf] %v273
    %306 = vst [vmem:[#allocation2 + $0x30] sm:$0xf] %v274
    %307 = vst [vmem:[#allocation2 + $0x34] sm:$0xf] %v275
    %308 = vst [vmem:[#allocation2 + $0x38] sm:$0xf] %v276
    %309 = vst [vmem:[#allocation2 + $0x3c] sm:$0xf] %v277
    // Predicated region
    $region10: #{tpu_custom_call.1} parent=1 // pred_check
      _
    $region11: #{tpu_custom_call.1} parent=1 // pred_check_branch
      %311 = sbr.rel (0) target = $region13
    $region12: #{tpu_custom_call.1} parent=1 // pred_region
      %s313 = ssub.s32 1024, 1024
      %314 = vsyncadd [#allocation3], %s313
      %s315 = sshll.u32 [#allocation2], 4
      %s316 = int_to_ptr.vmem [resolvable:$true] %s315
      %321 = dma.vmem_to_hbm [thread:$0]  %s316, 1024, %s2, [#allocation3], 64, 64, 4
    $region13: #{tpu_custom_call.1} parent=1 // pred_fallthru
      _
    // Predicated region
    $region14: #{tpu_custom_call.1} parent=1 // pred_check
      _
    $region15: #{tpu_custom_call.1} parent=1 // pred_check_branch
      %323 = sbr.rel (0) target = $region17
    $region16: #{tpu_custom_call.1} parent=1 // pred_region
      %324 = dma.done [#allocation3], 1024
    $region17: #{tpu_custom_call.1} parent=1 // pred_fallthru
      _
    %325 = vsyncpa [#allocation3], 1

</llo_original>
